<compile_context>
chip_gen: v7x
topology: tpu7x:2x2x1
jax: 0.10.0
libtpu: 0.0.40
codegen_flags: <defaults>
</compile_context>

<pallas_src>
import numpy as np
import jax
import jax.numpy as jnp
from jax.experimental import pallas as pl
from jax.experimental.pallas import tpu as pltpu

d_k = d_v = 16
_SCALE = np.float32(1.0 / np.sqrt(d_k))


def _sdpa_kernel(q_ref, k_ref, v_ref, mask_ref, ctx_ref, attn_ref):
    # q_ref: (G, Sq, Dk), k_ref: (G, Sk, Dk), v_ref: (G, Sk, Dv),
    # mask_ref: (G, Sq, Sk) int8 (nonzero => masked)
    # Fold the 1/sqrt(d_k) scale into q (cheaper than scaling the score matrix).
    q = q_ref[...].astype(jnp.float32) * _SCALE
    k = k_ref[...].astype(jnp.float32)
    v = v_ref[...].astype(jnp.float32)
    mask = mask_ref[...]

    # scores[g, q, k] = sum_d q[g, q, d] * k[g, k, d]   (no transpose materialized)
    scores = jnp.einsum("gqd,gkd->gqk", q, k, preferred_element_type=jnp.float32)
    # masked_fill_(attn_mask, -1e9)
    scores = jnp.where(mask != 0, jnp.float32(-1000000000.0), scores)

    # numerically-stable softmax over the last dim (all elementwise math in f32)
    m = jnp.max(scores, axis=-1, keepdims=True)
    e = jnp.exp(scores - m)
    denom = jnp.sum(e, axis=-1, keepdims=True)
    # EUP approximate reciprocal + one Newton step to restore f32 accuracy.
    r = pl.reciprocal(denom, approx=True)
    r = r * (jnp.float32(2.0) - denom * r)
    attn = e * r

    # context = attn @ V  (batched over the G heads in this block)
    ctx = jnp.einsum("gqk,gkd->gqd", attn, v, preferred_element_type=jnp.float32)

    attn_ref[...] = attn.astype(attn_ref.dtype)
    ctx_ref[...] = ctx.astype(ctx_ref.dtype)


def _choose_group(BH, Sq, Sk, Dk, Dv, vmem_budget_bytes=8 << 20):
    """Pick how many (batch, head) pairs to process per grid step.

    Largest divisor of BH that (a) fits a conservative VMEM budget (inputs +
    outputs, double-buffered) and (b) still leaves >=2 grid steps when possible
    so the grid can be sharded across TensorCores on v7x.
    """
    per_head_bytes = (
        4 * (Sq * Dk + Sk * Dk + Sk * Dv + Sq * Dv + Sq * Sk)  # f32 q/k/v/ctx/attn
        + Sq * Sk  # int8 mask
    )
    max_g = max(1, vmem_budget_bytes // (2 * per_head_bytes))  # x2 double-buffer
    divisors = [g for g in range(1, BH + 1) if BH % g == 0 and g <= max_g]
    if not divisors:
        return 1
    multi_step = [g for g in divisors if BH // g >= 2]
    return max(multi_step) if multi_step else max(divisors)


def scaled_dot_product_attention(Q, K, V, attn_mask):
    """Q: [B,H,Sq,Dk], K: [B,H,Sk,Dk], V: [B,H,Sk,Dv], attn_mask: [B,H,Sq,Sk] bool.
    Returns (context [B,H,Sq,Dv], attn [B,H,Sq,Sk])."""
    B, H, Sq, Dk = Q.shape
    Sk = K.shape[2]
    Dv = V.shape[3]
    BH = B * H

    G = _choose_group(BH, Sq, Sk, Dk, Dv)
    grid = (BH // G,)

    q = Q.reshape(BH, Sq, Dk)
    k = K.reshape(BH, Sk, Dk)
    v = V.reshape(BH, Sk, Dv)
    m = attn_mask.astype(jnp.int8).reshape(BH, Sq, Sk)  # int8: 4x less HBM than int32

    ctx, attn = pl.pallas_call(
        _sdpa_kernel,
        out_shape=(
            jax.ShapeDtypeStruct((BH, Sq, Dv), Q.dtype),
            jax.ShapeDtypeStruct((BH, Sq, Sk), jnp.float32),
        ),
        grid_spec=pltpu.PrefetchScalarGridSpec(
            num_scalar_prefetch=0,
            grid=grid,
            in_specs=[
                pl.BlockSpec((G, Sq, Dk), lambda i: (i, 0, 0)),
                pl.BlockSpec((G, Sk, Dk), lambda i: (i, 0, 0)),
                pl.BlockSpec((G, Sk, Dv), lambda i: (i, 0, 0)),
                pl.BlockSpec((G, Sq, Sk), lambda i: (i, 0, 0)),
            ],
            out_specs=[
                pl.BlockSpec((G, Sq, Dv), lambda i: (i, 0, 0)),
                pl.BlockSpec((G, Sq, Sk), lambda i: (i, 0, 0)),
            ],
        ),
        compiler_params=pltpu.CompilerParams(
            dimension_semantics=("parallel",)),
    )(q, k, v, m)

    return ctx.reshape(B, H, Sq, Dv), attn.reshape(B, H, Sq, Sk)


def _reference(Q, K, V, attn_mask):
    scores = jnp.matmul(Q, jnp.swapaxes(K, -1, -2)) / np.sqrt(d_k)
    scores = jnp.where(attn_mask, -1000000000.0, scores)
    attn = jax.nn.softmax(scores, axis=-1)
    context = jnp.matmul(attn, V)
    return context, attn


if __name__ == "__main__":
    B, H, Sq, Sk = 2, 2, 8, 8
    key = jax.random.PRNGKey(0)
    kq, kk, kv, km = jax.random.split(key, 4)

    Q = jax.random.normal(kq, (B, H, Sq, d_k), dtype=jnp.float32)
    K = jax.random.normal(kk, (B, H, Sk, d_k), dtype=jnp.float32)
    V = jax.random.normal(kv, (B, H, Sk, d_v), dtype=jnp.float32)
    attn_mask = jax.random.uniform(km, (B, H, Sq, Sk)) < 0.25  # bool mask

    ctx, attn = scaled_dot_product_attention(Q, K, V, attn_mask)
    ctx = jax.block_until_ready(ctx)
    attn = jax.block_until_ready(attn)

    ref_ctx, ref_attn = _reference(Q, K, V, attn_mask)
    np.testing.assert_allclose(np.asarray(ctx), np.asarray(ref_ctx), atol=1e-5, rtol=1e-5)
    np.testing.assert_allclose(np.asarray(attn), np.asarray(ref_attn), atol=1e-5, rtol=1e-5)

    print("KERNEL_OK")
</pallas_src>

<mosaic_0001>
module attributes {stable_mosaic.version = 11 : i64} {
  func.func @_sdpa_kernel(%arg0: i32, %arg1: memref<2x8x16xf32, #tpu.memory_space<vmem>>, %arg2: memref<2x8x16xf32, #tpu.memory_space<vmem>>, %arg3: memref<2x8x16xf32, #tpu.memory_space<vmem>>, %arg4: memref<2x8x8xi8, #tpu.memory_space<vmem>>, %arg5: memref<2x8x16xf32, #tpu.memory_space<vmem>>, %arg6: memref<2x8x8xf32, #tpu.memory_space<vmem>>) attributes {dimension_semantics = [#tpu.dimension_semantics<parallel>], iteration_bounds = array<i64: 2>, scalar_prefetch = 0 : i64, scratch_operands = 0 : i64, tpu.core_type = #tpu.core_type<tc>, window_params = [{transform_indices = @transform_0, window_bounds = array<i64: 2, 8, 16>}, {transform_indices = @transform_1, window_bounds = array<i64: 2, 8, 16>}, {transform_indices = @transform_2, window_bounds = array<i64: 2, 8, 16>}, {transform_indices = @transform_3, window_bounds = array<i64: 2, 8, 8>}, {transform_indices = @transform_4, window_bounds = array<i64: 2, 8, 16>}, {transform_indices = @transform_5, window_bounds = array<i64: 2, 8, 8>}]} {
    %c0 = arith.constant 0 : index
    %c0_0 = arith.constant 0 : index
    %c0_1 = arith.constant 0 : index
    %0 = vector.load %arg1[%c0, %c0_0, %c0_1] : memref<2x8x16xf32, #tpu.memory_space<vmem>>, vector<2x8x16xf32>
    %cst = arith.constant 2.500000e-01 : f32
    %1 = vector.broadcast %cst : f32 to vector<2x8x16xf32>
    %2 = arith.mulf %0, %1 : vector<2x8x16xf32>
    %c0_2 = arith.constant 0 : index
    %c0_3 = arith.constant 0 : index
    %c0_4 = arith.constant 0 : index
    %3 = vector.load %arg2[%c0_2, %c0_3, %c0_4] : memref<2x8x16xf32, #tpu.memory_space<vmem>>, vector<2x8x16xf32>
    %c0_5 = arith.constant 0 : index
    %c0_6 = arith.constant 0 : index
    %c0_7 = arith.constant 0 : index
    %4 = vector.load %arg3[%c0_5, %c0_6, %c0_7] : memref<2x8x16xf32, #tpu.memory_space<vmem>>, vector<2x8x16xf32>
    %c0_8 = arith.constant 0 : index
    %c0_9 = arith.constant 0 : index
    %c0_10 = arith.constant 0 : index
    %5 = vector.load %arg4[%c0_8, %c0_9, %c0_10] : memref<2x8x8xi8, #tpu.memory_space<vmem>>, vector<2x8x8xi8>
    "tpu.trace_start"() <{level = 10 : i32, message = "gqd,gkd->gqk"}> : () -> ()
    %cst_11 = arith.constant dense<0.000000e+00> : vector<2x8x8xf32>
    %6 = tpu.matmul %2, %3, %cst_11 {dimension_numbers = #tpu.dot_dimension_numbers<[2], [2], [1], [1], [0, 0, 0, 1, 1, 1], [0], [0]>} : vector<2x8x16xf32>, vector<2x8x16xf32>, vector<2x8x8xf32> -> vector<2x8x8xf32>
    %c0_i8 = arith.constant 0 : i8
    "tpu.trace_stop"() : () -> ()
    %7 = vector.broadcast %c0_i8 : i8 to vector<2x8x8xi8>
    %8 = arith.cmpi ne, %5, %7 : vector<2x8x8xi8>
    %cst_12 = arith.constant -1.000000e+09 : f32
    %9 = vector.broadcast %cst_12 : f32 to vector<2x8x8xf32>
    %10 = arith.select %8, %9, %6 : vector<2x8x8xi1>, vector<2x8x8xf32>
    %cst_13 = arith.constant dense<0xFF800000> : vector<2x8xf32>
    %11 = vector.multi_reduction <maximumf>, %10, %cst_13 [2] : vector<2x8x8xf32> to vector<2x8xf32>
    %12 = vector.shape_cast %11 : vector<2x8xf32> to vector<2x8x1xf32>
    %13 = vector.broadcast %12 : vector<2x8x1xf32> to vector<2x8x8xf32>
    %14 = arith.subf %10, %13 : vector<2x8x8xf32>
    %15 = math.exp %14 : vector<2x8x8xf32>
    %cst_14 = arith.constant dense<0.000000e+00> : vector<2x8xf32>
    %16 = vector.multi_reduction <add>, %15, %cst_14 [2] : vector<2x8x8xf32> to vector<2x8xf32>
    %17 = vector.shape_cast %16 : vector<2x8xf32> to vector<2x8x1xf32>
    %18 = tpu.reciprocal %17 {approx = true} : vector<2x8x1xf32> -> vector<2x8x1xf32>
    %19 = arith.mulf %17, %18 : vector<2x8x1xf32>
    %cst_15 = arith.constant 2.000000e+00 : f32
    %20 = vector.broadcast %cst_15 : f32 to vector<2x8x1xf32>
    %21 = arith.subf %20, %19 : vector<2x8x1xf32>
    %22 = arith.mulf %18, %21 : vector<2x8x1xf32>
    %23 = vector.broadcast %22 : vector<2x8x1xf32> to vector<2x8x8xf32>
    %24 = arith.mulf %15, %23 : vector<2x8x8xf32>
    "tpu.trace_start"() <{level = 10 : i32, message = "gqk,gkd->gqd"}> : () -> ()
    %cst_16 = arith.constant dense<0.000000e+00> : vector<2x8x16xf32>
    %25 = tpu.matmul %24, %4, %cst_16 {dimension_numbers = #tpu.dot_dimension_numbers<[2], [1], [1], [2], [0, 0, 0, 1, 1, 2], [0], [0]>} : vector<2x8x8xf32>, vector<2x8x16xf32>, vector<2x8x16xf32> -> vector<2x8x16xf32>
    "tpu.trace_stop"() : () -> ()
    %c0_17 = arith.constant 0 : index
    %c0_18 = arith.constant 0 : index
    %c0_19 = arith.constant 0 : index
    %26 = vector.load %arg6[%c0_17, %c0_18, %c0_19] : memref<2x8x8xf32, #tpu.memory_space<vmem>>, vector<2x8x8xf32>
    tpu.vector_store %arg6[%c0_17, %c0_18, %c0_19], %24 {strides = array<i32>} : memref<2x8x8xf32, #tpu.memory_space<vmem>>, vector<2x8x8xf32>,
    %c0_20 = arith.constant 0 : index
    %c0_21 = arith.constant 0 : index
    %c0_22 = arith.constant 0 : index
    %27 = vector.load %arg5[%c0_20, %c0_21, %c0_22] : memref<2x8x16xf32, #tpu.memory_space<vmem>>, vector<2x8x16xf32>
    tpu.vector_store %arg5[%c0_20, %c0_21, %c0_22], %25 {strides = array<i32>} : memref<2x8x16xf32, #tpu.memory_space<vmem>>, vector<2x8x16xf32>,
    return
  }
  func.func @transform_0(%arg0: i32) -> (i32, i32, i32) {
    %c0_i32 = arith.constant 0 : i32
    %c0_i32_0 = arith.constant 0 : i32
    %c0_i32_1 = arith.constant 0 : i32
    return %arg0, %c0_i32, %c0_i32_0 : i32, i32, i32
  }
  func.func @transform_1(%arg0: i32) -> (i32, i32, i32) {
    %c0_i32 = arith.constant 0 : i32
    %c0_i32_0 = arith.constant 0 : i32
    %c0_i32_1 = arith.constant 0 : i32
    return %arg0, %c0_i32, %c0_i32_0 : i32, i32, i32
  }
  func.func @transform_2(%arg0: i32) -> (i32, i32, i32) {
    %c0_i32 = arith.constant 0 : i32
    %c0_i32_0 = arith.constant 0 : i32
    %c0_i32_1 = arith.constant 0 : i32
    return %arg0, %c0_i32, %c0_i32_0 : i32, i32, i32
  }
  func.func @transform_3(%arg0: i32) -> (i32, i32, i32) {
    %c0_i32 = arith.constant 0 : i32
    %c0_i32_0 = arith.constant 0 : i32
    %c0_i32_1 = arith.constant 0 : i32
    return %arg0, %c0_i32, %c0_i32_0 : i32, i32, i32
  }
  func.func @transform_4(%arg0: i32) -> (i32, i32, i32) {
    %c0_i32 = arith.constant 0 : i32
    %c0_i32_0 = arith.constant 0 : i32
    %c0_i32_1 = arith.constant 0 : i32
    return %arg0, %c0_i32, %c0_i32_0 : i32, i32, i32
  }
  func.func @transform_5(%arg0: i32) -> (i32, i32, i32) {
    %c0_i32 = arith.constant 0 : i32
    %c0_i32_0 = arith.constant 0 : i32
    %c0_i32_1 = arith.constant 0 : i32
    return %arg0, %c0_i32, %c0_i32_0 : i32, i32, i32
  }
}

</mosaic_0001>

<llo_original>
// kernel: tpu_custom_call.1
$region0: #{tpu_custom_call.1}
  #allocation0 [shape = 'u32[]', space=smem, size = 0x4, offset = 0x4, fixed_abs, tag = 'smem constant byte address 0x4 - core index']
  #allocation1 [shape = 'u32[144,128]{1,0:T(1,128)}', space=vmem, size = 0x12000, scoped, tag = 'internal scratch']
  %s0 = inlined_call_operand.hbm [shape: f32[4,8,16], index: 0, kind: input, shape index: {}]
  %s1 = inlined_call_operand.hbm [shape: f32[4,8,16], index: 1, kind: input, shape index: {}]
  %s2 = inlined_call_operand.hbm [shape: f32[4,8,16], index: 2, kind: input, shape index: {}]
  %s3 = inlined_call_operand.vmem [shape: s8[4,8,8], index: 3, kind: input, shape index: {}]
  %s4 = inlined_call_operand.hbm [shape: f32[4,8,16], index: 4, kind: output, shape index: {0}]
  %s5 = inlined_call_operand.hbm [shape: f32[4,8,8], index: 5, kind: output, shape index: {1}]
  %6 = xla_tuple %s4, %s5
  %s7 = sld [smem:[#allocation0]]
  $region69: #{tpu_custom_call.1} parent=0
    _
  %s9 = ssub.s32 1, %s7
  %s10 = scalar_select 0, %s9, %s7
  $region1: #{tpu_custom_call.1} parent=0
    #allocation2 [shape = 'u8[16384]{0}', space=vmem, size = 0x4000, scoped, tag = 'input window, operand 0']
    #allocation3 [shape = 's32[2]{0}', space=sflag, size = 0x8, scoped, tag = 'scoped memory for tpu_custom_call.1']
    #allocation4 [shape = 's32[2]{0}', space=sflag, size = 0x8, scoped, tag = 'scoped memory for tpu_custom_call.1']
    #allocation5 [shape = 'u8[16384]{0}', space=vmem, size = 0x4000, scoped, tag = 'input window, operand 1']
    #allocation6 [shape = 's32[2]{0}', space=sflag, size = 0x8, scoped, tag = 'scoped memory for tpu_custom_call.1']
    #allocation7 [shape = 'u8[16384]{0}', space=vmem, size = 0x4000, scoped, tag = 'input window, operand 2']
    #allocation8 [shape = 'u8[16384]{0}', space=vmem, size = 0x4000, scoped, tag = 'output window, operand 0']
    #allocation9 [shape = 'u8[16384]{0}', space=vmem, size = 0x4000, scoped, tag = 'output window, operand 1']
    #allocation10 [shape = 's32[2]{0}', space=sflag, size = 0x8, scoped, tag = 'scoped memory for tpu_custom_call.1']
    %11 = vsyncpa [#allocation3], 0
    %s12 = scalar_lea.sflag [#allocation3], 1
    %13 = vsyncpa %s12, 0
    %14 = vsyncpa [#allocation6], 0
    %s15 = scalar_lea.sflag [#allocation6], 1
    %16 = vsyncpa %s15, 0
    %17 = vsyncpa [#allocation4], 0
    %s18 = scalar_lea.sflag [#allocation4], 1
    %19 = vsyncpa %s18, 0
    %20 = vsyncpa [#allocation10], 0
    %s21 = scalar_lea.sflag [#allocation10], 1
    %22 = vsyncpa %s21, 0
    loop: start=0, step=1, limit=4
    $region2: #{tpu_custom_call.1} parent=1 // loop_pre_header
      _
    $region3: #{tpu_custom_call.1} parent=1 // loop_header
      %s24 = sphi 0, %s28
      %p25 = scmp.ge.s32.totalorder %s24, 4
      %s34 = sphi 0, %s36
      %s37 = sphi 0, %s34
      %s38 = sphi 0, %s37
      %s54 = sphi 0, %s38
      %s60 = sphi 0, %s62
      %s63 = sphi 0, %s60
      %s64 = sphi 0, %s63
      %s80 = sphi 0, %s64
      %s86 = sphi 0, %s88
      %s89 = sphi 0, %s86
      %s90 = sphi 0, %s89
      %s106 = sphi 0, %s90
      %s112 = sphi 0, %s114
      %s115 = sphi 0, %s112
      %s116 = sphi 0, %s115
      %s132 = sphi 0, %s116
      %s138 = sphi 0, %s140
      %s141 = sphi 0, %s138
      %s142 = sphi 0, %s141
      %s158 = sphi 0, %s142
      %s164 = sphi 0, %s166
      %s167 = sphi 0, %s164
      %s168 = sphi 0, %s167
      %s184 = sphi 0, %s168
    $region4: #{tpu_custom_call.1} parent=1 // loop_header_branch
      %27 = sbr.rel (%p25) target = $region8
    $region5: #{tpu_custom_call.1} parent=1 // loop_body
      %s29 = ssub.s32 %s24, 1
      %s30 = ssub.s32 %s24, 2
      %s31 = sadd.s32 %s24, 1
      %s32 = ssub.s32 %s24, %s31
      %p33 = scmp.eq.s32.totalorder %s32, 0
      %s35 = sadd.s32 %s34, 1
      %s36 = scalar_select %p33, %s34, %s35
      %p39 = pneg %p33
      %p40 = scmp.eq.s32.totalorder %s24, 1
      %p41 = por %p39, %p40
      %p42 = scmp.ne.s32.totalorder %s34, %s37
      %p43 = scmp.eq.s32.totalorder %s24, 0
      %p44 = por %p42, %p43
      %p45 = scmp.ne.s32.totalorder %s34, %s37
      %p46 = scmp.eq.s32.totalorder %s29, 1
      %p47 = por %p45, %p46
      %p48 = scmp.ne.s32.totalorder %s37, %s38
      %p49 = scmp.eq.s32.totalorder %s29, 0
      %p50 = por %p48, %p49
      %p51 = scmp.ne.s32.totalorder %s37, %s38
      %p52 = scmp.eq.s32.totalorder %s30, 1
      %p53 = por %p51, %p52
      %p55 = scmp.ne.s32.totalorder %s38, %s54
      %p56 = scmp.eq.s32.totalorder %s30, 0
      %p57 = por %p55, %p56
      %s58 = ssub.s32 %s24, %s31
      %p59 = scmp.eq.s32.totalorder %s58, 0
      %s61 = sadd.s32 %s60, 1
      %s62 = scalar_select %p59, %s60, %s61
      %p65 = pneg %p59
      %p66 = scmp.eq.s32.totalorder %s24, 1
      %p67 = por %p65, %p66
      %p68 = scmp.ne.s32.totalorder %s60, %s63
      %p69 = scmp.eq.s32.totalorder %s24, 0
      %p70 = por %p68, %p69
      %p71 = scmp.ne.s32.totalorder %s60, %s63
      %p72 = scmp.eq.s32.totalorder %s29, 1
      %p73 = por %p71, %p72
      %p74 = scmp.ne.s32.totalorder %s63, %s64
      %p75 = scmp.eq.s32.totalorder %s29, 0
      %p76 = por %p74, %p75
      %p77 = scmp.ne.s32.totalorder %s63, %s64
      %p78 = scmp.eq.s32.totalorder %s30, 1
      %p79 = por %p77, %p78
      %p81 = scmp.ne.s32.totalorder %s64, %s80
      %p82 = scmp.eq.s32.totalorder %s30, 0
      %p83 = por %p81, %p82
      %s84 = ssub.s32 %s24, %s31
      %p85 = scmp.eq.s32.totalorder %s84, 0
      %s87 = sadd.s32 %s86, 1
      %s88 = scalar_select %p85, %s86, %s87
      %p91 = pneg %p85
      %p92 = scmp.eq.s32.totalorder %s24, 1
      %p93 = por %p91, %p92
      %p94 = scmp.ne.s32.totalorder %s86, %s89
      %p95 = scmp.eq.s32.totalorder %s24, 0
      %p96 = por %p94, %p95
      %p97 = scmp.ne.s32.totalorder %s86, %s89
      %p98 = scmp.eq.s32.totalorder %s29, 1
      %p99 = por %p97, %p98
      %p100 = scmp.ne.s32.totalorder %s89, %s90
      %p101 = scmp.eq.s32.totalorder %s29, 0
      %p102 = por %p100, %p101
      %p103 = scmp.ne.s32.totalorder %s89, %s90
      %p104 = scmp.eq.s32.totalorder %s30, 1
      %p105 = por %p103, %p104
      %p107 = scmp.ne.s32.totalorder %s90, %s106
      %p108 = scmp.eq.s32.totalorder %s30, 0
      %p109 = por %p107, %p108
      %s110 = ssub.s32 %s24, %s31
      %p111 = scmp.eq.s32.totalorder %s110, 0
      %s113 = sadd.s32 %s112, 1
      %s114 = scalar_select %p111, %s112, %s113
      %p117 = pneg %p111
      %p118 = scmp.eq.s32.totalorder %s24, 1
      %p119 = por %p117, %p118
      %p120 = scmp.ne.s32.totalorder %s112, %s115
      %p121 = scmp.eq.s32.totalorder %s24, 0
      %p122 = por %p120, %p121
      %p123 = scmp.ne.s32.totalorder %s112, %s115
      %p124 = scmp.eq.s32.totalorder %s29, 1
      %p125 = por %p123, %p124
      %p126 = scmp.ne.s32.totalorder %s115, %s116
      %p127 = scmp.eq.s32.totalorder %s29, 0
      %p128 = por %p126, %p127
      %p129 = scmp.ne.s32.totalorder %s115, %s116
      %p130 = scmp.eq.s32.totalorder %s30, 1
      %p131 = por %p129, %p130
      %p133 = scmp.ne.s32.totalorder %s116, %s132
      %p134 = scmp.eq.s32.totalorder %s30, 0
      %p135 = por %p133, %p134
      %s136 = ssub.s32 %s24, %s31
      %p137 = scmp.eq.s32.totalorder %s136, 0
      %s139 = sadd.s32 %s138, 1
      %s140 = scalar_select %p137, %s138, %s139
      %p143 = pneg %p137
      %p144 = scmp.eq.s32.totalorder %s24, 1
      %p145 = por %p143, %p144
      %p146 = scmp.ne.s32.totalorder %s138, %s141
      %p147 = scmp.eq.s32.totalorder %s24, 0
      %p148 = por %p146, %p147
      %p149 = scmp.ne.s32.totalorder %s138, %s141
      %p150 = scmp.eq.s32.totalorder %s29, 1
      %p151 = por %p149, %p150
      %p152 = scmp.ne.s32.totalorder %s141, %s142
      %p153 = scmp.eq.s32.totalorder %s29, 0
      %p154 = por %p152, %p153
      %p155 = scmp.ne.s32.totalorder %s141, %s142
      %p156 = scmp.eq.s32.totalorder %s30, 1
      %p157 = por %p155, %p156
      %p159 = scmp.ne.s32.totalorder %s142, %s158
      %p160 = scmp.eq.s32.totalorder %s30, 0
      %p161 = por %p159, %p160
      %s162 = ssub.s32 %s24, %s31
      %p163 = scmp.eq.s32.totalorder %s162, 0
      %s165 = sadd.s32 %s164, 1
      %s166 = scalar_select %p163, %s164, %s165
      %p169 = pneg %p163
      %p170 = scmp.eq.s32.totalorder %s24, 1
      %p171 = por %p169, %p170
      %p172 = scmp.ne.s32.totalorder %s164, %s167
      %p173 = scmp.eq.s32.totalorder %s24, 0
      %p174 = por %p172, %p173
      %p175 = scmp.ne.s32.totalorder %s164, %s167
      %p176 = scmp.eq.s32.totalorder %s29, 1
      %p177 = por %p175, %p176
      %p178 = scmp.ne.s32.totalorder %s167, %s168
      %p179 = scmp.eq.s32.totalorder %s29, 0
      %p180 = por %p178, %p179
      %p181 = scmp.ne.s32.totalorder %s167, %s168
      %p182 = scmp.eq.s32.totalorder %s30, 1
      %p183 = por %p181, %p182
      %p185 = scmp.ne.s32.totalorder %s168, %s184
      %p186 = scmp.eq.s32.totalorder %s30, 0
      %p187 = por %p185, %p186
      %p188 = scmp.le.s32.totalorder 1, %s24
      %p189 = scmp.lt.s32.totalorder %s24, 3
      %p190 = pnand %p188, %p189
      %p191 = pneg %p190
      // Predicated region
      $region9: #{tpu_custom_call.1} parent=5 // pred_check
        _
      $region10: #{tpu_custom_call.1} parent=5 // pred_check_branch
        %193 = sbr.rel (%p190) target = $region12
      $region11: #{tpu_custom_call.1} parent=5 // pred_region
        %s194 = ssub.s32 %s24, 1
      $region12: #{tpu_custom_call.1} parent=5 // pred_fallthru
        _
      %p195 = scmp.lt.s32.totalorder %s24, 2
      // Predicated region
      $region13: #{tpu_custom_call.1} parent=5 // pred_check
        %p196 = pneg %p195
      $region14: #{tpu_custom_call.1} parent=5 // pred_check_branch
        %198 = sbr.rel (%p196) target = $region16
      $region15: #{tpu_custom_call.1} parent=5 // pred_region
        // Predicated region
        $region17: #{tpu_custom_call.1} parent=15 // pred_check
          %p199 = pneg %p44
        $region18: #{tpu_custom_call.1} parent=15 // pred_check_branch
          %201 = sbr.rel (%p199) target = $region20
        $region19: #{tpu_custom_call.1} parent=15 // pred_region
          %s202 = sand.u32 %s34, 1
          %s203 = scalar_lea.sflag [#allocation3], %s202
          %s204 = sand.u32 %s34, 1
          %s205 = smul.addr %s204, 16
          %s206 = scalar_lea.vmem [#allocation2], %s205
          %s207 = smul.u32 2, %s24
          %s209 = ssub.s32 256, 256
          %210 = vsyncadd %s203, %s209
          %s211 = smul.addr %s207, 128
          %s212 = scalar_lea.hbm %s0, %s211
          %s213 = sshll.u32 %s206, 4
          %s214 = int_to_ptr.vmem [resolvable:$true] %s213
          %219 = dma.hbm_to_vmem [thread:$0]  %s212, 256, %s214, %s203, 128, 128, 8
        $region20: #{tpu_custom_call.1} parent=15 // pred_fallthru
          _
        // Predicated region
        $region21: #{tpu_custom_call.1} parent=15 // pred_check
          %p220 = pneg %p70
        $region22: #{tpu_custom_call.1} parent=15 // pred_check_branch
          %222 = sbr.rel (%p220) target = $region24
        $region23: #{tpu_custom_call.1} parent=15 // pred_region
          %s223 = sand.u32 %s24, 1
          %s224 = scalar_lea.sflag [#allocation6], %s223
          %s225 = sand.u32 %s60, 1
          %s226 = smul.addr %s225, 16
          %s227 = scalar_lea.vmem [#allocation5], %s226
          %s228 = smul.u32 2, %s24
          %s230 = ssub.s32 256, 256
          %231 = vsyncadd %s224, %s230
          %s232 = smul.addr %s228, 128
          %s233 = scalar_lea.hbm %s1, %s232
          %s234 = sshll.u32 %s227, 4
          %s235 = int_to_ptr.vmem [resolvable:$true] %s234
          %240 = dma.hbm_to_vmem [thread:$0]  %s233, 256, %s235, %s224, 128, 128, 8
        $region24: #{tpu_custom_call.1} parent=15 // pred_fallthru
          _
        // Predicated region
        $region25: #{tpu_custom_call.1} parent=15 // pred_check
          %p241 = pneg %p96
        $region26: #{tpu_custom_call.1} parent=15 // pred_check_branch
          %243 = sbr.rel (%p241) target = $region28
        $region27: #{tpu_custom_call.1} parent=15 // pred_region
          %s244 = sand.u32 %s24, 1
          %s245 = scalar_lea.sflag [#allocation6], %s244
          %s246 = sand.u32 %s86, 1
          %s247 = smul.addr %s246, 16
          %s248 = scalar_lea.vmem [#allocation7], %s247
          %s249 = smul.u32 2, %s24
          %s251 = ssub.s32 256, 256
          %252 = vsyncadd %s245, %s251
          %s253 = smul.addr %s249, 128
          %s254 = scalar_lea.hbm %s2, %s253
          %s255 = sshll.u32 %s248, 4
          %s256 = int_to_ptr.vmem [resolvable:$true] %s255
          %261 = dma.hbm_to_vmem [thread:$0]  %s254, 256, %s256, %s245, 128, 128, 8
        $region28: #{tpu_custom_call.1} parent=15 // pred_fallthru
          _
        // Predicated region
        $region29: #{tpu_custom_call.1} parent=15 // pred_check
          %p262 = pneg %p122
        $region30: #{tpu_custom_call.1} parent=15 // pred_check_branch
          %264 = sbr.rel (%p262) target = $region32
        $region31: #{tpu_custom_call.1} parent=15 // pred_region
          %s265 = smul.u32 2, %s24
          %p266 = scmp.lt.s32.totalorder %s265, 3
          %s267 = scalar_select %p266, %s265, 3
          %s268 = smul.addr %s267, 2
          %s269 = scalar_lea.vmem %s3, %s268
          %s270 = smul.u32 2, %s24
        $region32: #{tpu_custom_call.1} parent=15 // pred_fallthru
          _
      $region16: #{tpu_custom_call.1} parent=5 // pred_fallthru
        _
      %p271 = scmp.le.s32.totalorder 1, %s24
      %p272 = scmp.lt.s32.totalorder %s24, 3
      %p273 = pnand %p271, %p272
      %p274 = pneg %p273
      // Predicated region
      $region33: #{tpu_custom_call.1} parent=5 // pred_check
        _
      $region34: #{tpu_custom_call.1} parent=5 // pred_check_branch
        %276 = sbr.rel (%p273) target = $region36
      $region35: #{tpu_custom_call.1} parent=5 // pred_region
        %s277 = ssub.s32 %s24, 1
        %s278 = sand.u32 %s37, 1
        %s279 = scalar_lea.sflag [#allocation3], %s278
        %s280 = sand.u32 %s37, 1
        %s281 = smul.addr %s280, 16
        %s282 = scalar_lea.vmem [#allocation2], %s281
        // Predicated region
        $region37: #{tpu_custom_call.1} parent=35 // pred_check
          %p283 = pneg %p50
        $region38: #{tpu_custom_call.1} parent=35 // pred_check_branch
          %285 = sbr.rel (%p283) target = $region40
        $region39: #{tpu_custom_call.1} parent=35 // pred_region
          %286 = dma.done %s279, 256
        $region40: #{tpu_custom_call.1} parent=35 // pred_fallthru
          _
        %s287 = sand.u32 %s29, 1
        %s288 = scalar_lea.sflag [#allocation6], %s287
        %s289 = sand.u32 %s63, 1
        %s290 = smul.addr %s289, 16
        %s291 = scalar_lea.vmem [#allocation5], %s290
        // Predicated region
        $region41: #{tpu_custom_call.1} parent=35 // pred_check
          %p292 = pneg %p76
        $region42: #{tpu_custom_call.1} parent=35 // pred_check_branch
          %294 = sbr.rel (%p292) target = $region44
        $region43: #{tpu_custom_call.1} parent=35 // pred_region
          %295 = dma.done %s288, 256
        $region44: #{tpu_custom_call.1} parent=35 // pred_fallthru
          _
        %s296 = sand.u32 %s29, 1
        %s297 = scalar_lea.sflag [#allocation6], %s296
        %s298 = sand.u32 %s89, 1
        %s299 = smul.addr %s298, 16
        %s300 = scalar_lea.vmem [#allocation7], %s299
        // Predicated region
        $region45: #{tpu_custom_call.1} parent=35 // pred_check
          %p301 = pneg %p102
        $region46: #{tpu_custom_call.1} parent=35 // pred_check_branch
          %303 = sbr.rel (%p301) target = $region48
        $region47: #{tpu_custom_call.1} parent=35 // pred_region
          %304 = dma.done %s297, 256
        $region48: #{tpu_custom_call.1} parent=35 // pred_fallthru
          _
        %s305 = sand.u32 %s37, 1
        %s306 = scalar_lea.sflag [#allocation3], %s305
        %s307 = sand.u32 %s37, 1
        %s308 = smul.addr %s307, 16
        %s309 = scalar_lea.vmem [#allocation2], %s308
        %p310 = pneg %p50
        %p311 = pneg %p47
        %s312 = sand.u32 %s29, 1
        %s313 = scalar_lea.sflag [#allocation6], %s312
        %s314 = sand.u32 %s63, 1
        %s315 = smul.addr %s314, 16
        %s316 = scalar_lea.vmem [#allocation5], %s315
        %p317 = pneg %p76
        %p318 = pneg %p73
        %s319 = sand.u32 %s29, 1
        %s320 = scalar_lea.sflag [#allocation6], %s319
        %s321 = sand.u32 %s89, 1
        %s322 = smul.addr %s321, 16
        %s323 = scalar_lea.vmem [#allocation7], %s322
        %p324 = pneg %p102
        %p325 = pneg %p99
        %s326 = smul.u32 2, %s29
        %p327 = scmp.lt.s32.totalorder %s326, 3
        %s328 = scalar_select %p327, %s326, 3
        %s329 = smul.addr %s328, 2
        %s330 = scalar_lea.vmem %s3, %s329
        %p331 = pneg %p128
        %p332 = pneg %p125
        %p333 = pneg %p154
        %p334 = pneg %p151
        %s335 = sand.u32 %s141, 1
        %s336 = scalar_lea.sflag [#allocation4], %s335
        %s337 = sand.u32 %s141, 1
        %s338 = smul.addr %s337, 16
        %s339 = scalar_lea.vmem [#allocation8], %s338
        %p340 = pneg %p180
        %p341 = pneg %p177
        %s342 = sand.u32 %s167, 1
        %s343 = scalar_lea.sflag [#allocation10], %s342
        %s344 = sand.u32 %s167, 1
        %s345 = smul.addr %s344, 16
        %s346 = scalar_lea.vmem [#allocation9], %s345
        %s347 = smul.u32 2, %s29
        %s348 = smul.u32 2, %s29
        %s349 = smul.u32 2, %s29
        %s350 = smul.u32 2, %s29
        %p351 = scmp.lt.s32.totalorder %s350, 3
        %s352 = scalar_select %p351, %s350, 3
        %s353 = smul.addr %s352, 2
        %s354 = scalar_lea.vmem %s3, %s353
        %s355 = smul.u32 2, %s29
        %s356 = smul.u32 2, %s29
        %s357 = smul.u32 2, %s29
        %v360 = vld [vmem:[%s282] sm:$0xff]
        %v361 = vld [vmem:[%s282 + $0x8] sm:$0xff]
        %v362 = vmul.f32 %v360, 0.25
        %v363 = vmul.f32 %v361, 0.25
        %v364 = vld [vmem:[%s291] sm:$0xff]
        %v365 = vld [vmem:[%s291 + $0x8] sm:$0xff]
        %v366 = vld [vmem:[%s300] sm:$0xff]
        %v367 = vld [vmem:[%s300 + $0x8] sm:$0xff]
        %v368 = vld [vmem:[%s354] sm:$0x3]
        %v369 = vld [vmem:[%s354 + $0x2] sm:$0x3]
        %vm370 = vcmask 130048
        %v372 = vsel %vm370, %v362, 0
        %v375 = vsel %vm370, %v364, 0
        %377 = vmatprep.subr.mxu0 0.0
        %378 = vmatpush1.xpose.msra.mxu0 %v375
        %379 = vmatprep.subr.mxu0 0.0
        %380 = vmatpush1.xpose.msra.mxu0 0.0
        %381 = vmatprep.subr.mxu0 0.0
        %382 = vmatpush1.xpose.msra.mxu0 0.0
        %383 = vmatprep.subr.mxu0 0.0
        %384 = vmatpush1.xpose.msra.mxu0 0.0
        %385 = vmatprep.subr.mxu0 0.0
        %386 = vmatpush1.xpose.msra.mxu0 0.0
        %387 = vmatprep.subr.mxu0 0.0
        %388 = vmatpush1.xpose.msra.mxu0 0.0
        %389 = vmatprep.subr.mxu0 0.0
        %390 = vmatpush1.xpose.msra.mxu0 0.0
        %391 = vmatprep.subr.mxu0 0.0
        %392 = vmatpush1.xpose.msra.mxu0 0.0
        %393 = vmatprep.subr.mxu0 0.0
        %394 = vmatpush1.xpose.msra.mxu0 0.0
        %395 = vmatprep.subr.mxu0 0.0
        %396 = vmatpush1.xpose.msra.mxu0 0.0
        %397 = vmatprep.subr.mxu0 0.0
        %398 = vmatpush1.xpose.msra.mxu0 0.0
        %399 = vmatprep.subr.mxu0 0.0
        %400 = vmatpush1.xpose.msra.mxu0 0.0
        %401 = vmatprep.subr.mxu0 0.0
        %402 = vmatpush1.xpose.msra.mxu0 0.0
        %403 = vmatprep.subr.mxu0 0.0
        %404 = vmatpush1.xpose.msra.mxu0 0.0
        %405 = vmatprep.subr.mxu0 0.0
        %406 = vmatpush1.xpose.msra.mxu0 0.0
        %407 = vmatprep.subr.mxu0 0.0
        %408 = vmatpush1.xpose.msra.mxu0 0.0
        %409 = vmatprep.subr.mxu0 0.0
        %410 = vmatpush1.xpose.msra.mxu0 0.0
        %411 = vmatprep.subr.mxu0 0.0
        %412 = vmatpush1.xpose.msra.mxu0 0.0
        %413 = vmatprep.subr.mxu0 0.0
        %414 = vmatpush1.xpose.msra.mxu0 0.0
        %415 = vmatprep.subr.mxu0 0.0
        %416 = vmatpush1.xpose.msra.mxu0 0.0
        %417 = vmatprep.subr.mxu0 0.0
        %418 = vmatpush1.xpose.msra.mxu0 0.0
        %419 = vmatprep.subr.mxu0 0.0
        %420 = vmatpush1.xpose.msra.mxu0 0.0
        %421 = vmatprep.subr.mxu0 0.0
        %422 = vmatpush1.xpose.msra.mxu0 0.0
        %423 = vmatprep.subr.mxu0 0.0
        %424 = vmatpush1.xpose.msra.mxu0 0.0
        %425 = vmatprep.subr.mxu0 0.0
        %426 = vmatpush1.xpose.msra.mxu0 0.0
        %427 = vmatprep.subr.mxu0 0.0
        %428 = vmatpush1.xpose.msra.mxu0 0.0
        %429 = vmatprep.subr.mxu0 0.0
        %430 = vmatpush1.xpose.msra.mxu0 0.0
        %431 = vmatprep.subr.mxu0 0.0
        %432 = vmatpush1.xpose.msra.mxu0 0.0
        %433 = vmatprep.subr.mxu0 0.0
        %434 = vmatpush1.xpose.msra.mxu0 0.0
        %435 = vmatprep.subr.mxu0 0.0
        %436 = vmatpush1.xpose.msra.mxu0 0.0
        %437 = vmatprep.subr.mxu0 0.0
        %438 = vmatpush1.xpose.msra.mxu0 0.0
        %439 = vmatprep.subr.mxu0 0.0
        %440 = vmatpush1.xpose.msra.mxu0 0.0
        %441 = vmatprep.mubr.f32.mxu0 0.0
        %442 = vmatmul.mubr.f32.gmra.mrb[0].mxu0 %v372
        %v443 = vpop.f32.mrb[0].mxu0
        %v444 = vadd.f32 0.0, %v443
        %v445 = vpop.f32.mrb[0].mxu0
        %446 = vdwg.mxu0
        %v448 = vsel %vm370, %v363, 0
        %v451 = vsel %vm370, %v365, 0
        %453 = vmatprep.subr.mxu0 0.0
        %454 = vmatpush1.xpose.msra.mxu0 %v451
        %455 = vmatprep.subr.mxu0 0.0
        %456 = vmatpush1.xpose.msra.mxu0 0.0
        %457 = vmatprep.subr.mxu0 0.0
        %458 = vmatpush1.xpose.msra.mxu0 0.0
        %459 = vmatprep.subr.mxu0 0.0
        %460 = vmatpush1.xpose.msra.mxu0 0.0
        %461 = vmatprep.subr.mxu0 0.0
        %462 = vmatpush1.xpose.msra.mxu0 0.0
        %463 = vmatprep.subr.mxu0 0.0
        %464 = vmatpush1.xpose.msra.mxu0 0.0
        %465 = vmatprep.subr.mxu0 0.0
        %466 = vmatpush1.xpose.msra.mxu0 0.0
        %467 = vmatprep.subr.mxu0 0.0
        %468 = vmatpush1.xpose.msra.mxu0 0.0
        %469 = vmatprep.subr.mxu0 0.0
        %470 = vmatpush1.xpose.msra.mxu0 0.0
        %471 = vmatprep.subr.mxu0 0.0
        %472 = vmatpush1.xpose.msra.mxu0 0.0
        %473 = vmatprep.subr.mxu0 0.0
        %474 = vmatpush1.xpose.msra.mxu0 0.0
        %475 = vmatprep.subr.mxu0 0.0
        %476 = vmatpush1.xpose.msra.mxu0 0.0
        %477 = vmatprep.subr.mxu0 0.0
        %478 = vmatpush1.xpose.msra.mxu0 0.0
        %479 = vmatprep.subr.mxu0 0.0
        %480 = vmatpush1.xpose.msra.mxu0 0.0
        %481 = vmatprep.subr.mxu0 0.0
        %482 = vmatpush1.xpose.msra.mxu0 0.0
        %483 = vmatprep.subr.mxu0 0.0
        %484 = vmatpush1.xpose.msra.mxu0 0.0
        %485 = vmatprep.subr.mxu0 0.0
        %486 = vmatpush1.xpose.msra.mxu0 0.0
        %487 = vmatprep.subr.mxu0 0.0
        %488 = vmatpush1.xpose.msra.mxu0 0.0
        %489 = vmatprep.subr.mxu0 0.0
        %490 = vmatpush1.xpose.msra.mxu0 0.0
        %491 = vmatprep.subr.mxu0 0.0
        %492 = vmatpush1.xpose.msra.mxu0 0.0
        %493 = vmatprep.subr.mxu0 0.0
        %494 = vmatpush1.xpose.msra.mxu0 0.0
        %495 = vmatprep.subr.mxu0 0.0
        %496 = vmatpush1.xpose.msra.mxu0 0.0
        %497 = vmatprep.subr.mxu0 0.0
        %498 = vmatpush1.xpose.msra.mxu0 0.0
        %499 = vmatprep.subr.mxu0 0.0
        %500 = vmatpush1.xpose.msra.mxu0 0.0
        %501 = vmatprep.subr.mxu0 0.0
        %502 = vmatpush1.xpose.msra.mxu0 0.0
        %503 = vmatprep.subr.mxu0 0.0
        %504 = vmatpush1.xpose.msra.mxu0 0.0
        %505 = vmatprep.subr.mxu0 0.0
        %506 = vmatpush1.xpose.msra.mxu0 0.0
        %507 = vmatprep.subr.mxu0 0.0
        %508 = vmatpush1.xpose.msra.mxu0 0.0
        %509 = vmatprep.subr.mxu0 0.0
        %510 = vmatpush1.xpose.msra.mxu0 0.0
        %511 = vmatprep.subr.mxu0 0.0
        %512 = vmatpush1.xpose.msra.mxu0 0.0
        %513 = vmatprep.subr.mxu0 0.0
        %514 = vmatpush1.xpose.msra.mxu0 0.0
        %515 = vmatprep.subr.mxu0 0.0
        %516 = vmatpush1.xpose.msra.mxu0 0.0
        %517 = vmatprep.mubr.f32.mxu0 0.0
        %518 = vmatmul.mubr.f32.gmra.mrb[0].mxu0 %v448
        %v519 = vpop.f32.mrb[0].mxu0
        %v520 = vadd.f32 0.0, %v519
        %v521 = vpop.f32.mrb[0].mxu0
        %522 = vdwg.mxu0
        %vm523 = vnez %v368
        %vm524 = vnez %v369
        %v525 = vsel %vm523, 16843009, 0
        %v526 = vsel %vm524, 16843009, 0
        %v527 = vunpack.c.0.s8 %v525
        %v528 = vunpack.c.0.s8 %v526
        %vm529 = vcmp.ne.s32.totalorder %v527, 0
        %vm530 = vcmp.ne.s32.totalorder %v528, 0
        %v531 = vsel %vm529, -1e+09, %v444
        %v532 = vsel %vm530, -1e+09, %v520
        %vm533 = vcmask 64512
        %v534 = vsel %vm533, %v531, -inf
        %535 = vmax.xlane.f32.xlu0 %v534
        %v536 = vpop.xlane.xlu0 %535
        %v537 = vsel %vm533, %v532, -inf
        %538 = vmax.xlane.f32.xlu0 %v537
        %v539 = vpop.xlane.xlu0 %538
        %v540 = vsub.f32 %v531, %v536
        %v541 = vsub.f32 %v532, %v539
        %v542 = vmul.f32 %v540, 1.442695
        %v543 = vpow.pop %v542
        %v544 = vmul.f32 %v541, 1.442695
        %v545 = vpow.pop %v544
        %v546 = vsel %vm533, %v543, 0.0
        %547 = vadd.xlane.f32.xlu0 %v546
        %v548 = vpop.xlane.xlu0 %547
        %v549 = vsel %vm533, %v545, 0.0
        %550 = vadd.xlane.f32.xlu0 %v549
        %v551 = vpop.xlane.xlu0 %550
        %v552 = vrcp.pop %v548
        %v553 = vrcp.pop %v551
        %v554 = vmul.f32 %v548, %v552
        %v555 = vmul.f32 %v551, %v553
        %v556 = vsub.f32 2.0, %v554
        %v557 = vsub.f32 2.0, %v555
        %v558 = vmul.f32 %v552, %v556
        %v559 = vmul.f32 %v553, %v557
        %v560 = vmul.f32 %v543, %v558
        %v561 = vmul.f32 %v545, %v559
        %v563 = vsel %vm533, %v560, 0
        %565 = vmatprep.subr.mxu0 0.0
        %566 = vmatpush1.msra.mxu0 %v366
        %567 = vmatprep.subr.mxu0 0.0
        %568 = vmatpush1.msra.mxu0 0.0
        %569 = vmatprep.subr.mxu0 0.0
        %570 = vmatpush1.msra.mxu0 0.0
        %571 = vmatprep.subr.mxu0 0.0
        %572 = vmatpush1.msra.mxu0 0.0
        %573 = vmatprep.subr.mxu0 0.0
        %574 = vmatpush1.msra.mxu0 0.0
        %575 = vmatprep.subr.mxu0 0.0
        %576 = vmatpush1.msra.mxu0 0.0
        %577 = vmatprep.subr.mxu0 0.0
        %578 = vmatpush1.msra.mxu0 0.0
        %579 = vmatprep.subr.mxu0 0.0
        %580 = vmatpush1.msra.mxu0 0.0
        %581 = vmatprep.subr.mxu0 0.0
        %582 = vmatpush1.msra.mxu0 0.0
        %583 = vmatprep.subr.mxu0 0.0
        %584 = vmatpush1.msra.mxu0 0.0
        %585 = vmatprep.subr.mxu0 0.0
        %586 = vmatpush1.msra.mxu0 0.0
        %587 = vmatprep.subr.mxu0 0.0
        %588 = vmatpush1.msra.mxu0 0.0
        %589 = vmatprep.subr.mxu0 0.0
        %590 = vmatpush1.msra.mxu0 0.0
        %591 = vmatprep.subr.mxu0 0.0
        %592 = vmatpush1.msra.mxu0 0.0
        %593 = vmatprep.subr.mxu0 0.0
        %594 = vmatpush1.msra.mxu0 0.0
        %595 = vmatprep.subr.mxu0 0.0
        %596 = vmatpush1.msra.mxu0 0.0
        %597 = vmatprep.subr.mxu0 0.0
        %598 = vmatpush1.msra.mxu0 0.0
        %599 = vmatprep.subr.mxu0 0.0
        %600 = vmatpush1.msra.mxu0 0.0
        %601 = vmatprep.subr.mxu0 0.0
        %602 = vmatpush1.msra.mxu0 0.0
        %603 = vmatprep.subr.mxu0 0.0
        %604 = vmatpush1.msra.mxu0 0.0
        %605 = vmatprep.subr.mxu0 0.0
        %606 = vmatpush1.msra.mxu0 0.0
        %607 = vmatprep.subr.mxu0 0.0
        %608 = vmatpush1.msra.mxu0 0.0
        %609 = vmatprep.subr.mxu0 0.0
        %610 = vmatpush1.msra.mxu0 0.0
        %611 = vmatprep.subr.mxu0 0.0
        %612 = vmatpush1.msra.mxu0 0.0
        %613 = vmatprep.subr.mxu0 0.0
        %614 = vmatpush1.msra.mxu0 0.0
        %615 = vmatprep.subr.mxu0 0.0
        %616 = vmatpush1.msra.mxu0 0.0
        %617 = vmatprep.subr.mxu0 0.0
        %618 = vmatpush1.msra.mxu0 0.0
        %619 = vmatprep.subr.mxu0 0.0
        %620 = vmatpush1.msra.mxu0 0.0
        %621 = vmatprep.subr.mxu0 0.0
        %622 = vmatpush1.msra.mxu0 0.0
        %623 = vmatprep.subr.mxu0 0.0
        %624 = vmatpush1.msra.mxu0 0.0
        %625 = vmatprep.subr.mxu0 0.0
        %626 = vmatpush1.msra.mxu0 0.0
        %627 = vmatprep.subr.mxu0 0.0
        %628 = vmatpush1.msra.mxu0 0.0
        %629 = vmatprep.mubr.f32.mxu0 0.0
        %630 = vmatmul.mubr.f32.gmra.mrb[0].mxu0 %v563
        %v631 = vpop.f32.mrb[0].mxu0
        %v632 = vadd.f32 0.0, %v631
        %v633 = vpop.f32.mrb[0].mxu0
        %634 = vdwg.mxu0
        %v636 = vsel %vm533, %v561, 0
        %638 = vmatprep.subr.mxu0 0.0
        %639 = vmatpush1.msra.mxu0 %v367
        %640 = vmatprep.subr.mxu0 0.0
        %641 = vmatpush1.msra.mxu0 0.0
        %642 = vmatprep.subr.mxu0 0.0
        %643 = vmatpush1.msra.mxu0 0.0
        %644 = vmatprep.subr.mxu0 0.0
        %645 = vmatpush1.msra.mxu0 0.0
        %646 = vmatprep.subr.mxu0 0.0
        %647 = vmatpush1.msra.mxu0 0.0
        %648 = vmatprep.subr.mxu0 0.0
        %649 = vmatpush1.msra.mxu0 0.0
        %650 = vmatprep.subr.mxu0 0.0
        %651 = vmatpush1.msra.mxu0 0.0
        %652 = vmatprep.subr.mxu0 0.0
        %653 = vmatpush1.msra.mxu0 0.0
        %654 = vmatprep.subr.mxu0 0.0
        %655 = vmatpush1.msra.mxu0 0.0
        %656 = vmatprep.subr.mxu0 0.0
        %657 = vmatpush1.msra.mxu0 0.0
        %658 = vmatprep.subr.mxu0 0.0
        %659 = vmatpush1.msra.mxu0 0.0
        %660 = vmatprep.subr.mxu0 0.0
        %661 = vmatpush1.msra.mxu0 0.0
        %662 = vmatprep.subr.mxu0 0.0
        %663 = vmatpush1.msra.mxu0 0.0
        %664 = vmatprep.subr.mxu0 0.0
        %665 = vmatpush1.msra.mxu0 0.0
        %666 = vmatprep.subr.mxu0 0.0
        %667 = vmatpush1.msra.mxu0 0.0
        %668 = vmatprep.subr.mxu0 0.0
        %669 = vmatpush1.msra.mxu0 0.0
        %670 = vmatprep.subr.mxu0 0.0
        %671 = vmatpush1.msra.mxu0 0.0
        %672 = vmatprep.subr.mxu0 0.0
        %673 = vmatpush1.msra.mxu0 0.0
        %674 = vmatprep.subr.mxu0 0.0
        %675 = vmatpush1.msra.mxu0 0.0
        %676 = vmatprep.subr.mxu0 0.0
        %677 = vmatpush1.msra.mxu0 0.0
        %678 = vmatprep.subr.mxu0 0.0
        %679 = vmatpush1.msra.mxu0 0.0
        %680 = vmatprep.subr.mxu0 0.0
        %681 = vmatpush1.msra.mxu0 0.0
        %682 = vmatprep.subr.mxu0 0.0
        %683 = vmatpush1.msra.mxu0 0.0
        %684 = vmatprep.subr.mxu0 0.0
        %685 = vmatpush1.msra.mxu0 0.0
        %686 = vmatprep.subr.mxu0 0.0
        %687 = vmatpush1.msra.mxu0 0.0
        %688 = vmatprep.subr.mxu0 0.0
        %689 = vmatpush1.msra.mxu0 0.0
        %690 = vmatprep.subr.mxu0 0.0
        %691 = vmatpush1.msra.mxu0 0.0
        %692 = vmatprep.subr.mxu0 0.0
        %693 = vmatpush1.msra.mxu0 0.0
        %694 = vmatprep.subr.mxu0 0.0
        %695 = vmatpush1.msra.mxu0 0.0
        %696 = vmatprep.subr.mxu0 0.0
        %697 = vmatpush1.msra.mxu0 0.0
        %698 = vmatprep.subr.mxu0 0.0
        %699 = vmatpush1.msra.mxu0 0.0
        %700 = vmatprep.subr.mxu0 0.0
        %701 = vmatpush1.msra.mxu0 0.0
        %702 = vmatprep.mubr.f32.mxu0 0.0
        %703 = vmatmul.mubr.f32.gmra.mrb[0].mxu0 %v636
        %v704 = vpop.f32.mrb[0].mxu0
        %v705 = vadd.f32 0.0, %v704
        %v706 = vpop.f32.mrb[0].mxu0
        %707 = vdwg.mxu0
        %708 = vst.msk [vmem:[%s346] sm:$0xff] %vm533, %v560
        %709 = vst.msk [vmem:[%s346 + $0x8] sm:$0xff] %vm533, %v561
        %710 = vst.msk [vmem:[%s339] sm:$0xff] %vm370, %v632
        %711 = vst.msk [vmem:[%s339 + $0x8] sm:$0xff] %vm370, %v705
        %s712 = sand.u32 %s141, 1
        %s713 = scalar_lea.sflag [#allocation4], %s712
        %s714 = sand.u32 %s141, 1
        %s715 = smul.addr %s714, 16
        %s716 = scalar_lea.vmem [#allocation8], %s715
        %s717 = sand.u32 %s167, 1
        %s718 = scalar_lea.sflag [#allocation10], %s717
        %s719 = sand.u32 %s167, 1
        %s720 = smul.addr %s719, 16
        %s721 = scalar_lea.vmem [#allocation9], %s720
        // Predicated region
        $region49: #{tpu_custom_call.1} parent=35 // pred_check
          %p722 = pneg %p151
        $region50: #{tpu_custom_call.1} parent=35 // pred_check_branch
          %724 = sbr.rel (%p722) target = $region52
        $region51: #{tpu_custom_call.1} parent=35 // pred_region
          %s725 = smul.u32 2, %s29
          %s727 = ssub.s32 256, 256
          %728 = vsyncadd %s713, %s727
          %s729 = smul.addr %s725, 128
          %s730 = scalar_lea.hbm %s4, %s729
          %s731 = sshll.u32 %s716, 4
          %s732 = int_to_ptr.vmem [resolvable:$true] %s731
          %737 = dma.vmem_to_hbm [thread:$0]  %s732, 256, %s730, %s713, 128, 128, 8
        $region52: #{tpu_custom_call.1} parent=35 // pred_fallthru
          _
        // Predicated region
        $region53: #{tpu_custom_call.1} parent=35 // pred_check
          %p738 = pneg %p177
        $region54: #{tpu_custom_call.1} parent=35 // pred_check_branch
          %740 = sbr.rel (%p738) target = $region56
        $region55: #{tpu_custom_call.1} parent=35 // pred_region
          %s741 = smul.u32 2, %s29
          %s743 = ssub.s32 256, 256
          %744 = vsyncadd %s718, %s743
          %s745 = smul.addr %s741, 128
          %s746 = scalar_lea.hbm %s5, %s745
          %s747 = sshll.u32 %s721, 4
          %s748 = int_to_ptr.vmem [resolvable:$true] %s747
          %753 = dma.vmem_to_hbm [thread:$0]  %s748, 256, %s746, %s718, 128, 128, 8
        $region56: #{tpu_custom_call.1} parent=35 // pred_fallthru
          _
      $region36: #{tpu_custom_call.1} parent=5 // pred_fallthru
        _
      %p754 = scmp.le.s32.totalorder 2, %s24
      // Predicated region
      $region57: #{tpu_custom_call.1} parent=5 // pred_check
        %p755 = pneg %p754
      $region58: #{tpu_custom_call.1} parent=5 // pred_check_branch
        %757 = sbr.rel (%p755) target = $region60
      $region59: #{tpu_custom_call.1} parent=5 // pred_region
        %s758 = ssub.s32 %s24, 2
        // Predicated region
        $region61: #{tpu_custom_call.1} parent=59 // pred_check
          %p759 = pneg %p157
        $region62: #{tpu_custom_call.1} parent=59 // pred_check_branch
          %761 = sbr.rel (%p759) target = $region64
        $region63: #{tpu_custom_call.1} parent=59 // pred_region
          %s762 = sand.u32 %s142, 1
          %s763 = scalar_lea.sflag [#allocation4], %s762
          %s764 = sand.u32 %s142, 1
          %s765 = smul.addr %s764, 16
          %s766 = scalar_lea.vmem [#allocation8], %s765
          %767 = dma.done %s763, 256
        $region64: #{tpu_custom_call.1} parent=59 // pred_fallthru
          _
        // Predicated region
        $region65: #{tpu_custom_call.1} parent=59 // pred_check
          %p768 = pneg %p183
        $region66: #{tpu_custom_call.1} parent=59 // pred_check_branch
          %770 = sbr.rel (%p768) target = $region68
        $region67: #{tpu_custom_call.1} parent=59 // pred_region
          %s771 = sand.u32 %s168, 1
          %s772 = scalar_lea.sflag [#allocation10], %s771
          %s773 = sand.u32 %s168, 1
          %s774 = smul.addr %s773, 16
          %s775 = scalar_lea.vmem [#allocation9], %s774
          %776 = dma.done %s772, 256
        $region68: #{tpu_custom_call.1} parent=59 // pred_fallthru
          _
      $region60: #{tpu_custom_call.1} parent=5 // pred_fallthru
        _
    $region6: #{tpu_custom_call.1} parent=1 // loop_footer
      %s28 = sadd.s32 1, %s24
    $region7: #{tpu_custom_call.1} parent=1 // loop_footer_branch
      %23 = sbr.rel target = $region3
    $region8: #{tpu_custom_call.1} parent=1 // loop_exit
      _
    %777 = vsyncpa [#allocation3], 1
    %s778 = scalar_lea.sflag [#allocation3], 1
    %779 = vsyncpa %s778, 1
    %780 = vsyncpa [#allocation6], 1
    %s781 = scalar_lea.sflag [#allocation6], 1
    %782 = vsyncpa %s781, 1
    %783 = vsyncpa [#allocation4], 1
    %s784 = scalar_lea.sflag [#allocation4], 1
    %785 = vsyncpa %s784, 1
    %786 = vsyncpa [#allocation10], 1
    %s787 = scalar_lea.sflag [#allocation10], 1
    %788 = vsyncpa %s787, 1

</llo_original>
